<compile_context>
chip_gen: v5e
topology: v5e:2x2
jax: 0.10.0
libtpu: 0.0.40
codegen_flags: <defaults>
</compile_context>

<pallas_src>
import functools

import jax
import jax.numpy as jnp
from jax import lax
from jax.experimental import pallas as pl
from jax.experimental.pallas import tpu as pltpu


def _round_up(x, m):
    return ((x + m - 1) // m) * m


def _vmem_capacity_bytes():
    """Per-core VMEM capacity; conservative fallback if the query fails."""
    try:
        info = pltpu.get_tpu_info()
        for attr in ("vmem_capacity_bytes", "vmem_size_bytes", "vmem_bytes"):
            val = getattr(info, attr, None)
            if val:
                return int(val)
    except Exception:
        pass
    return 64 << 20  # v7x per-TensorCore VMEM (smallest of the generations)


def _dot_nt(a, b, gram_dtype=jnp.float32):
    """a @ b.T on the MXU without materializing a transpose (NT contraction)."""
    if gram_dtype != jnp.float32:
        a = a.astype(gram_dtype)
        b = b.astype(gram_dtype)
    return lax.dot_general(
        a, b, (((1,), (1,)), ((), ())), preferred_element_type=jnp.float32
    )


# ----------------------------------------------------------------------------
# One-shot kernel: everything VMEM-resident (small / medium problems).
# ----------------------------------------------------------------------------
def _mmd_rbf_one_shot_kernel(src_ref, tgt_ref, loss_ref, *, gram_dtype):
    """src_ref/tgt_ref: (b, Fp) f32 VMEM.  loss_ref: (1, 1) f32 VMEM."""
    s = src_ref[...]
    t = tgt_ref[...]
    b = s.shape[0]
    n = 2 * b

    sq_s = jnp.sum(s * s, axis=1, keepdims=True)  # (b, 1)
    sq_t = jnp.sum(t * t, axis=1, keepdims=True)  # (b, 1)

    # Closed-form sum of all pairwise squared distances (no L2 matrix needed):
    #   sum_{i,j} ||x_i - x_j||^2 = 2*N*sum_i||x_i||^2 - 2*||sum_i x_i||^2
    col_sum = (jnp.sum(s, axis=0, keepdims=True)
               + jnp.sum(t, axis=0, keepdims=True))          # (1, Fp)
    sum_sq = jnp.sum(sq_s) + jnp.sum(sq_t)
    l2_sum = 2.0 * n * sum_sq - 2.0 * jnp.sum(col_sum * col_sum)
    # TODO(synk): like the reference, bandwidth == 0 (all rows identical) gives
    # inf/NaN; no epsilon clamp so the semantics match the PyTorch module.
    bandwidth = l2_sum / jnp.float32(n * n - n)
    neg_inv_bw = -1.0 / bandwidth  # one scalar divide; N^2 multiplies below

    def quadrant(x, y, x_sq, y_sq):
        # Quadrants are processed one at a time (l2 -> exp -> sum -> discard),
        # so only ~one b*b temporary chain is live at any point.
        g = _dot_nt(x, y, gram_dtype)
        l2 = jnp.maximum(x_sq + y_sq.T - 2.0 * g, 0.0)  # clamp Gram round-off
        return jnp.sum(jnp.exp(l2 * neg_inv_bw))

    k_sum = (quadrant(s, s, sq_s, sq_s)
             + quadrant(t, t, sq_t, sq_t)
             - 2.0 * quadrant(s, t, sq_s, sq_t))
    loss_ref[...] = jnp.reshape(k_sum / jnp.float32(b * b), (1, 1))


def _mmd_one_shot(source, target, b, fp, vmem_limit, gram_dtype):
    out = pl.pallas_call(
        functools.partial(_mmd_rbf_one_shot_kernel, gram_dtype=gram_dtype),
        out_shape=jax.ShapeDtypeStruct((1, 1), jnp.float32),
        in_specs=[
            pl.BlockSpec((b, fp), lambda: (0, 0),
                         memory_space=pltpu.MemorySpace.VMEM),
            pl.BlockSpec((b, fp), lambda: (0, 0),
                         memory_space=pltpu.MemorySpace.VMEM),
        ],
        out_specs=pl.BlockSpec((1, 1), lambda: (0, 0),
                               memory_space=pltpu.MemorySpace.VMEM),
        compiler_params=pltpu.CompilerParams(vmem_limit_bytes=vmem_limit),
    )(source, target)
    return out[0, 0]


# ----------------------------------------------------------------------------
# Tiled single-pass path (symmetry-aware tile list, per-tile partial sums).
# ----------------------------------------------------------------------------
def _tiled_quadrant_kernel(nib_ref, rb_ref, cb_ref, w_ref, rv_ref, cv_ref,
                           rows_ref, cols_ref, out_ref, *,
                           needs_mask, gram_dtype):
    """One (tile x tile) block of K, weighted and reduced to a partial sum."""
    t = pl.program_id(0)
    rows = rows_ref[...]
    cols = cols_ref[...]

    sq_r = jnp.sum(rows * rows, axis=1, keepdims=True)   # (tile, 1)
    sq_c = jnp.sum(cols * cols, axis=1, keepdims=True)   # (tile, 1)
    g = _dot_nt(rows, cols, gram_dtype)                   # (tile, tile)
    l2 = jnp.maximum(sq_r + sq_c.T - 2.0 * g, 0.0)
    k = jnp.exp(l2 * nib_ref[0])

    if needs_mask:
        tile = rows.shape[0]
        rmask = lax.broadcasted_iota(jnp.int32, (tile, tile), 0) < rv_ref[t]
        cmask = lax.broadcasted_iota(jnp.int32, (tile, tile), 1) < cv_ref[t]
        k = jnp.where(jnp.logical_and(rmask, cmask), k, 0.0)

    partial = w_ref[t].astype(jnp.float32) * jnp.sum(k)
    # Lane-dense (1, 8, 128) block per tile; reduced in the wrapper.
    out_ref[...] = jnp.broadcast_to(jnp.reshape(partial, (1, 1, 1)),
                                    out_ref.shape)


def _mmd_tiled(source_p, target_p, b, bp, fp, tile, neg_inv_bw,
               vmem_limit, gram_dtype):
    # TODO(synk): the concat costs one O(N*Fp) HBM round-trip; negligible next
    # to the O(N^2*Fp) pass, but removable with three per-quadrant calls.
    total = jnp.concatenate([source_p, target_p], axis=0)  # (2*bp, Fp)
    gi = bp // tile
    needs_mask = bp != b

    # Static tile list: ss / tt upper triangles (off-diag weight 2, diag 1),
    # st quadrant once with weight -2 (covers st + ts by symmetry).
    row_blk, col_blk, weights, row_valid, col_valid = [], [], [], [], []

    def _valid(blk):
        return max(0, min(b - blk * tile, tile))

    def _add(rb, cb, w, rv, cv):
        row_blk.append(rb); col_blk.append(cb); weights.append(w)
        row_valid.append(rv); col_valid.append(cv)

    for dom in (0, 1):                       # 0 = source block rows, 1 = target
        for i in range(gi):
            for j in range(i, gi):
                _add(dom * gi + i, dom * gi + j,
                     1 if i == j else 2, _valid(i), _valid(j))
    for i in range(gi):                      # st quadrant
        for j in range(gi):
            _add(i, gi + j, -2, _valid(i), _valid(j))

    num_tiles = len(row_blk)
    row_blk = jnp.asarray(row_blk, jnp.int32)
    col_blk = jnp.asarray(col_blk, jnp.int32)
    weights = jnp.asarray(weights, jnp.int32)
    row_valid = jnp.asarray(row_valid, jnp.int32)
    col_valid = jnp.asarray(col_valid, jnp.int32)
    nib = jnp.reshape(neg_inv_bw, (1,)).astype(jnp.float32)

    rows_spec = pl.BlockSpec(
        (tile, fp), lambda t, nib_r, rb_r, cb_r, w_r, rv_r, cv_r: (rb_r[t], 0))
    cols_spec = pl.BlockSpec(
        (tile, fp), lambda t, nib_r, rb_r, cb_r, w_r, rv_r, cv_r: (cb_r[t], 0))
    out_spec = pl.BlockSpec(
        (1, 8, 128), lambda t, nib_r, rb_r, cb_r, w_r, rv_r, cv_r: (t, 0, 0))

    cost = pl.CostEstimate(
        flops=int(2 * num_tiles * tile * tile * fp
                  + 8 * num_tiles * tile * tile),
        transcendentals=int(num_tiles * tile * tile),
        bytes_accessed=int(8 * num_tiles * tile * fp
                           + 4 * num_tiles * 8 * 128),
    )

    partials = pl.pallas_call(
        functools.partial(_tiled_quadrant_kernel,
                          needs_mask=needs_mask, gram_dtype=gram_dtype),
        out_shape=jax.ShapeDtypeStruct((num_tiles, 8, 128), jnp.float32),
        grid_spec=pltpu.PrefetchScalarGridSpec(
            num_scalar_prefetch=6,
            grid=(num_tiles,),
            in_specs=[rows_spec, cols_spec],
            out_specs=out_spec,
        ),
        compiler_params=pltpu.CompilerParams(
            dimension_semantics=("parallel",),   # per-tile partials -> megacore
            vmem_limit_bytes=vmem_limit,
        ),
        cost_estimate=cost,
    )(nib, row_blk, col_blk, weights, row_valid, col_valid, total, total)

    return jnp.sum(partials[:, 0, 0]) / jnp.float32(b * b)


# ----------------------------------------------------------------------------
# Public wrapper.
# ----------------------------------------------------------------------------
def _pick_tile(fp, budget_bytes):
    # 2 inputs x 2 pipeline buffers x (tile, fp) f32 blocks + ~4 (tile, tile)
    # f32 temporaries must fit the scoped-VMEM budget.
    for t in (512, 256, 128, 64, 32, 16, 8):
        if 16 * t * fp + 16 * t * t <= budget_bytes:
            return t
    # TODO(synk): for enormous feature dims even tile=8 overflows; an inner
    # feature-chunk grid axis accumulating the Gram in VMEM scratch would fix
    # this — not needed for typical DeepDA feature sizes.
    return 8


def single_mmd_loss(source, target, *, force_tiled=False, tile=None,
                    use_bf16_gram=False):
    """RBF single-bandwidth MMD loss between source and target feature batches."""
    assert source.shape == target.shape and source.ndim == 2
    b, f = source.shape
    source = source.astype(jnp.float32)
    target = target.astype(jnp.float32)
    gram_dtype = jnp.bfloat16 if use_bf16_gram else jnp.float32

    # Zero-pad features to a lane-dense multiple of 128 (semantics-preserving:
    # zero columns change neither Gram values nor squared norms).
    fp = _round_up(f, 128)
    if fp != f:
        source = jnp.pad(source, ((0, 0), (0, fp - f)))
        target = jnp.pad(target, ((0, 0), (0, fp - f)))

    cap = _vmem_capacity_bytes()
    one_shot_budget = int(cap * 0.75)   # ~96 MiB on v5e/v6e, ~48 MiB on v7x
    tiled_budget = int(cap * 0.70)

    # Peak one-shot footprint: both inputs (with buffering slack) + ~4 b*b f32
    # temporaries (quadrants are processed sequentially inside the kernel).
    one_shot_bytes = 16 * b * fp + 16 * b * b
    use_tiled = force_tiled or one_shot_bytes > one_shot_budget

    if not use_tiled:
        return _mmd_one_shot(source, target, b, fp, one_shot_budget, gram_dtype)

    if tile is None:
        tile = _pick_tile(fp, tiled_budget)
    tile = max(8, int(tile))

    # Closed-form bandwidth (O(N*F), computed on the real rows only):
    #   sum(L2) = 2*N*sum_i||x_i||^2 - 2*||sum_i x_i||^2
    n = 2 * b
    sum_sq = jnp.sum(source * source) + jnp.sum(target * target)
    col_sum = jnp.sum(source, axis=0) + jnp.sum(target, axis=0)
    l2_sum = 2.0 * n * sum_sq - 2.0 * jnp.sum(col_sum * col_sum)
    bandwidth = l2_sum / jnp.float32(n * n - n)
    neg_inv_bw = -1.0 / bandwidth

    # Zero-pad the batch up to a multiple of the tile; padded rows are masked
    # out of every tile sum inside the kernel.
    bp = _round_up(b, tile)
    if bp != b:
        source = jnp.pad(source, ((0, bp - b), (0, 0)))
        target = jnp.pad(target, ((0, bp - b), (0, 0)))

    return _mmd_tiled(source, target, b, bp, fp, tile, neg_inv_bw,
                      tiled_budget, gram_dtype)


# ----------------------------------------------------------------------------
# Pure-JAX reference mirroring the (intended) PyTorch semantics.
# ----------------------------------------------------------------------------
def _reference_jax(source, target):
    b = source.shape[0]
    total = jnp.concatenate([source, target], axis=0).astype(jnp.float32)
    n = total.shape[0]
    diff = total[None, :, :] - total[:, None, :]
    l2 = jnp.sum(diff * diff, axis=2)
    bandwidth = jnp.sum(l2) / (n * n - n)
    k = jnp.exp(-l2 / bandwidth)
    xx = jnp.mean(k[:b, :b])
    yy = jnp.mean(k[b:, b:])
    xy = jnp.mean(k[:b, b:])
    yx = jnp.mean(k[b:, :b])
    return xx + yy - xy - yx


if __name__ == "__main__":
    key = jax.random.PRNGKey(0)
    k1, k2 = jax.random.split(key)
    batch, feat = 8, 32
    source = jax.random.normal(k1, (batch, feat), dtype=jnp.float32)
    target = jax.random.normal(k2, (batch, feat), dtype=jnp.float32) + 0.5

    ref = jax.block_until_ready(_reference_jax(source, target))

    # One-shot (quadrant) kernel path (auto-selected for small shapes).
    loss = jax.block_until_ready(single_mmd_loss(source, target))
    assert jnp.isfinite(loss), "one-shot loss is not finite"
    assert abs(float(loss) - float(ref)) < 1e-4, (float(loss), float(ref))

    # Tiled symmetry-aware path, exact tiling (tile divides b).
    loss_tiled = jax.block_until_ready(
        single_mmd_loss(source, target, force_tiled=True, tile=8))
    assert jnp.isfinite(loss_tiled), "tiled loss is not finite"
    assert abs(float(loss_tiled) - float(ref)) < 1e-4, (
        float(loss_tiled), float(ref))

    # Tiled path with row padding + iota masking (tile does not divide b).
    loss_masked = jax.block_until_ready(
        single_mmd_loss(source, target, force_tiled=True, tile=16))
    assert jnp.isfinite(loss_masked), "masked tiled loss is not finite"
    assert abs(float(loss_masked) - float(ref)) < 1e-4, (
        float(loss_masked), float(ref))

    print("KERNEL_OK")
</pallas_src>

<mosaic_0001>
module attributes {stable_mosaic.version = 11 : i64} {
  func.func @_mmd_rbf_one_shot_kernel(%arg0: memref<8x128xf32, #tpu.memory_space<vmem>>, %arg1: memref<8x128xf32, #tpu.memory_space<vmem>>, %arg2: memref<1x1xf32, #tpu.memory_space<vmem>>) attributes {dimension_semantics = [], scalar_prefetch = 0 : i64, scratch_operands = 0 : i64, tpu.core_type = #tpu.core_type<tc>} {
    %c0 = arith.constant 0 : index
    %c0_0 = arith.constant 0 : index
    %0 = vector.load %arg0[%c0, %c0_0] : memref<8x128xf32, #tpu.memory_space<vmem>>, vector<8x128xf32>
    %c0_1 = arith.constant 0 : index
    %c0_2 = arith.constant 0 : index
    %1 = vector.load %arg1[%c0_1, %c0_2] : memref<8x128xf32, #tpu.memory_space<vmem>>, vector<8x128xf32>
    %2 = arith.mulf %0, %0 : vector<8x128xf32>
    %cst = arith.constant dense<0.000000e+00> : vector<8xf32>
    %3 = vector.multi_reduction <add>, %2, %cst [1] : vector<8x128xf32> to vector<8xf32>
    %4 = vector.shape_cast %3 : vector<8xf32> to vector<8x1xf32>
    %5 = arith.mulf %1, %1 : vector<8x128xf32>
    %cst_3 = arith.constant dense<0.000000e+00> : vector<8xf32>
    %6 = vector.multi_reduction <add>, %5, %cst_3 [1] : vector<8x128xf32> to vector<8xf32>
    %7 = vector.shape_cast %6 : vector<8xf32> to vector<8x1xf32>
    %cst_4 = arith.constant dense<0.000000e+00> : vector<128xf32>
    %8 = vector.multi_reduction <add>, %0, %cst_4 [0] : vector<8x128xf32> to vector<128xf32>
    %9 = vector.shape_cast %8 : vector<128xf32> to vector<1x128xf32>
    %cst_5 = arith.constant dense<0.000000e+00> : vector<128xf32>
    %10 = vector.multi_reduction <add>, %1, %cst_5 [0] : vector<8x128xf32> to vector<128xf32>
    %11 = vector.shape_cast %10 : vector<128xf32> to vector<1x128xf32>
    %12 = arith.addf %9, %11 : vector<1x128xf32>
    %13 = vector.shape_cast %4 : vector<8x1xf32> to vector<1x8x1xf32>
    %cst_6 = arith.constant dense<0.000000e+00> : vector<1xf32>
    %14 = vector.multi_reduction <add>, %13, %cst_6 [1, 2] : vector<1x8x1xf32> to vector<1xf32>
    %15 = vector.shape_cast %14 : vector<1xf32> to vector<1x1x1xf32>
    %16 = vector.extract %15[0, 0, 0] : f32 from vector<1x1x1xf32>
    %17 = vector.shape_cast %7 : vector<8x1xf32> to vector<1x8x1xf32>
    %cst_7 = arith.constant dense<0.000000e+00> : vector<1xf32>
    %18 = vector.multi_reduction <add>, %17, %cst_7 [1, 2] : vector<1x8x1xf32> to vector<1xf32>
    %19 = vector.shape_cast %18 : vector<1xf32> to vector<1x1x1xf32>
    %20 = vector.extract %19[0, 0, 0] : f32 from vector<1x1x1xf32>
    %21 = arith.addf %16, %20 : f32
    %cst_8 = arith.constant 3.200000e+01 : f32
    %22 = arith.mulf %cst_8, %21 : f32
    %23 = arith.mulf %12, %12 : vector<1x128xf32>
    %24 = vector.shape_cast %23 : vector<1x128xf32> to vector<1x1x128xf32>
    %cst_9 = arith.constant dense<0.000000e+00> : vector<1xf32>
    %25 = vector.multi_reduction <add>, %24, %cst_9 [1, 2] : vector<1x1x128xf32> to vector<1xf32>
    %26 = vector.shape_cast %25 : vector<1xf32> to vector<1x1x1xf32>
    %27 = vector.extract %26[0, 0, 0] : f32 from vector<1x1x1xf32>
    %cst_10 = arith.constant 2.000000e+00 : f32
    %28 = arith.mulf %cst_10, %27 : f32
    %29 = arith.subf %22, %28 : f32
    %cst_11 = arith.constant 2.400000e+02 : f32
    %30 = arith.divf %29, %cst_11 : f32
    %cst_12 = arith.constant -1.000000e+00 : f32
    %31 = arith.divf %cst_12, %30 : f32
    %cst_13 = arith.constant dense<0.000000e+00> : vector<8x8xf32>
    %32 = tpu.matmul %0, %0, %cst_13 {dimension_numbers = #tpu.dot_dimension_numbers<[1], [1], [0], [0], [0, 0, 1, 0], [], []>} : vector<8x128xf32>, vector<8x128xf32>, vector<8x8xf32> -> vector<8x8xf32>
    %33 = tpu.transpose %4, [1, 0] : vector<8x1xf32> -> vector<1x8xf32>
    %34 = vector.broadcast %4 : vector<8x1xf32> to vector<8x8xf32>
    %35 = vector.broadcast %33 : vector<1x8xf32> to vector<8x8xf32>
    %36 = arith.addf %34, %35 : vector<8x8xf32>
    %cst_14 = arith.constant 2.000000e+00 : f32
    %37 = vector.broadcast %cst_14 : f32 to vector<8x8xf32>
    %38 = arith.mulf %37, %32 : vector<8x8xf32>
    %39 = arith.subf %36, %38 : vector<8x8xf32>
    %cst_15 = arith.constant 0.000000e+00 : f32
    %40 = vector.broadcast %cst_15 : f32 to vector<8x8xf32>
    %41 = arith.maximumf %39, %40 : vector<8x8xf32>
    %42 = vector.broadcast %31 : f32 to vector<8x8xf32>
    %43 = arith.mulf %41, %42 : vector<8x8xf32>
    %44 = math.exp %43 : vector<8x8xf32>
    %45 = vector.shape_cast %44 : vector<8x8xf32> to vector<1x8x8xf32>
    %cst_16 = arith.constant dense<0.000000e+00> : vector<1xf32>
    %46 = vector.multi_reduction <add>, %45, %cst_16 [1, 2] : vector<1x8x8xf32> to vector<1xf32>
    %47 = vector.shape_cast %46 : vector<1xf32> to vector<1x1x1xf32>
    %48 = vector.extract %47[0, 0, 0] : f32 from vector<1x1x1xf32>
    %cst_17 = arith.constant dense<0.000000e+00> : vector<8x8xf32>
    %49 = tpu.matmul %1, %1, %cst_17 {dimension_numbers = #tpu.dot_dimension_numbers<[1], [1], [0], [0], [0, 0, 1, 0], [], []>} : vector<8x128xf32>, vector<8x128xf32>, vector<8x8xf32> -> vector<8x8xf32>
    %50 = tpu.transpose %7, [1, 0] : vector<8x1xf32> -> vector<1x8xf32>
    %51 = vector.broadcast %7 : vector<8x1xf32> to vector<8x8xf32>
    %52 = vector.broadcast %50 : vector<1x8xf32> to vector<8x8xf32>
    %53 = arith.addf %51, %52 : vector<8x8xf32>
    %cst_18 = arith.constant 2.000000e+00 : f32
    %54 = vector.broadcast %cst_18 : f32 to vector<8x8xf32>
    %55 = arith.mulf %54, %49 : vector<8x8xf32>
    %56 = arith.subf %53, %55 : vector<8x8xf32>
    %cst_19 = arith.constant 0.000000e+00 : f32
    %57 = vector.broadcast %cst_19 : f32 to vector<8x8xf32>
    %58 = arith.maximumf %56, %57 : vector<8x8xf32>
    %59 = vector.broadcast %31 : f32 to vector<8x8xf32>
    %60 = arith.mulf %58, %59 : vector<8x8xf32>
    %61 = math.exp %60 : vector<8x8xf32>
    %62 = vector.shape_cast %61 : vector<8x8xf32> to vector<1x8x8xf32>
    %cst_20 = arith.constant dense<0.000000e+00> : vector<1xf32>
    %63 = vector.multi_reduction <add>, %62, %cst_20 [1, 2] : vector<1x8x8xf32> to vector<1xf32>
    %64 = vector.shape_cast %63 : vector<1xf32> to vector<1x1x1xf32>
    %65 = vector.extract %64[0, 0, 0] : f32 from vector<1x1x1xf32>
    %66 = arith.addf %48, %65 : f32
    %cst_21 = arith.constant dense<0.000000e+00> : vector<8x8xf32>
    %67 = tpu.matmul %0, %1, %cst_21 {dimension_numbers = #tpu.dot_dimension_numbers<[1], [1], [0], [0], [0, 0, 1, 0], [], []>} : vector<8x128xf32>, vector<8x128xf32>, vector<8x8xf32> -> vector<8x8xf32>
    %68 = tpu.transpose %7, [1, 0] : vector<8x1xf32> -> vector<1x8xf32>
    %69 = vector.broadcast %4 : vector<8x1xf32> to vector<8x8xf32>
    %70 = vector.broadcast %68 : vector<1x8xf32> to vector<8x8xf32>
    %71 = arith.addf %69, %70 : vector<8x8xf32>
    %cst_22 = arith.constant 2.000000e+00 : f32
    %72 = vector.broadcast %cst_22 : f32 to vector<8x8xf32>
    %73 = arith.mulf %72, %67 : vector<8x8xf32>
    %74 = arith.subf %71, %73 : vector<8x8xf32>
    %cst_23 = arith.constant 0.000000e+00 : f32
    %75 = vector.broadcast %cst_23 : f32 to vector<8x8xf32>
    %76 = arith.maximumf %74, %75 : vector<8x8xf32>
    %77 = vector.broadcast %31 : f32 to vector<8x8xf32>
    %78 = arith.mulf %76, %77 : vector<8x8xf32>
    %79 = math.exp %78 : vector<8x8xf32>
    %80 = vector.shape_cast %79 : vector<8x8xf32> to vector<1x8x8xf32>
    %cst_24 = arith.constant dense<0.000000e+00> : vector<1xf32>
    %81 = vector.multi_reduction <add>, %80, %cst_24 [1, 2] : vector<1x8x8xf32> to vector<1xf32>
    %82 = vector.shape_cast %81 : vector<1xf32> to vector<1x1x1xf32>
    %83 = vector.extract %82[0, 0, 0] : f32 from vector<1x1x1xf32>
    %cst_25 = arith.constant 2.000000e+00 : f32
    %84 = arith.mulf %cst_25, %83 : f32
    %85 = arith.subf %66, %84 : f32
    %cst_26 = arith.constant 6.400000e+01 : f32
    %86 = arith.divf %85, %cst_26 : f32
    %87 = vector.broadcast %86 : f32 to vector<1x1xf32>
    %c0_27 = arith.constant 0 : index
    %c0_28 = arith.constant 0 : index
    %88 = vector.load %arg2[%c0_27, %c0_28] : memref<1x1xf32, #tpu.memory_space<vmem>>, vector<1x1xf32>
    tpu.vector_store %arg2[%c0_27, %c0_28], %87 {strides = array<i32>} : memref<1x1xf32, #tpu.memory_space<vmem>>, vector<1x1xf32>,
    return
  }
}

</mosaic_0001>

<llo_original>
// kernel: tpu_custom_call.1
$region0: #{tpu_custom_call.1}
  #allocation0 [shape = 'u32[]', space=smem, size = 0x4, offset = 0x4, fixed_abs, tag = 'smem constant byte address 0x4 - core index']
  #allocation1 [shape = 'u32[72,128]{1,0:T(1,128)}', space=vmem, size = 0x9000, scoped, tag = 'internal scratch']
  %s0 = inlined_call_operand.hbm [shape: f32[8,128], index: 0, kind: input, shape index: {}]
  %s1 = inlined_call_operand.hbm [shape: f32[8,128], index: 1, kind: input, shape index: {}]
  %s2 = inlined_call_operand.hbm [shape: f32[1,1], index: 2, kind: output, shape index: {}]
  %s3 = sld [smem:[#allocation0]]
  $region26: #{tpu_custom_call.1} parent=0
    _
  %s5 = ssub.s32 1, %s3
  %s6 = scalar_select 0, %s5, %s3
  $region1: #{tpu_custom_call.1} parent=0
    #allocation2 [shape = 'u8[4096]{0}', space=vmem, size = 0x1000, scoped, tag = 'input window, operand 0, single buffered']
    #allocation3 [shape = 's32[1]{0}', space=sflag, size = 0x4, scoped, tag = 'scoped memory for tpu_custom_call.1']
    #allocation4 [shape = 's32[1]{0}', space=sflag, size = 0x4, scoped, tag = 'scoped memory for tpu_custom_call.1']
    #allocation5 [shape = 'u8[4096]{0}', space=vmem, size = 0x1000, scoped, tag = 'input window, operand 1, single buffered']
    #allocation6 [shape = 's32[1]{0}', space=sflag, size = 0x4, scoped, tag = 'scoped memory for tpu_custom_call.1']
    #allocation7 [shape = 'u8[512]{0}', space=vmem, size = 0x400, scoped, tag = 'output window, operand 0, single buffered']
    %7 = vsyncpa [#allocation3], 0
    %8 = vsyncpa [#allocation6], 0
    %9 = vsyncpa [#allocation4], 0
    // Predicated region
    $region2: #{tpu_custom_call.1} parent=1 // pred_check
      _
    $region3: #{tpu_custom_call.1} parent=1 // pred_check_branch
      %11 = sbr.rel (0) target = $region5
    $region4: #{tpu_custom_call.1} parent=1 // pred_region
      %13 = vsyncadd [#allocation3], 0
      %s15 = sshll.u32 %s0, 4
      %s16 = int_to_ptr.hbm [resolvable:$true] %s15
      %s17 = sshll.u32 [#allocation2], 4
      %s18 = int_to_ptr.vmem [resolvable:$true] %s17
      %20 = dma.hbm_to_vmem [thread:$0]  %s16, 128, %s18, [#allocation3]
    $region5: #{tpu_custom_call.1} parent=1 // pred_fallthru
      _
    // Predicated region
    $region6: #{tpu_custom_call.1} parent=1 // pred_check
      _
    $region7: #{tpu_custom_call.1} parent=1 // pred_check_branch
      %22 = sbr.rel (0) target = $region9
    $region8: #{tpu_custom_call.1} parent=1 // pred_region
      %24 = vsyncadd [#allocation6], 0
      %s26 = sshll.u32 %s1, 4
      %s27 = int_to_ptr.hbm [resolvable:$true] %s26
      %s28 = sshll.u32 [#allocation5], 4
      %s29 = int_to_ptr.vmem [resolvable:$true] %s28
      %31 = dma.hbm_to_vmem [thread:$0]  %s27, 128, %s29, [#allocation6]
    $region9: #{tpu_custom_call.1} parent=1 // pred_fallthru
      _
    // Predicated region
    $region10: #{tpu_custom_call.1} parent=1 // pred_check
      _
    $region11: #{tpu_custom_call.1} parent=1 // pred_check_branch
      %33 = sbr.rel (0) target = $region13
    $region12: #{tpu_custom_call.1} parent=1 // pred_region
      %35 = dma.done [#allocation3], 128
    $region13: #{tpu_custom_call.1} parent=1 // pred_fallthru
      _
    // Predicated region
    $region14: #{tpu_custom_call.1} parent=1 // pred_check
      _
    $region15: #{tpu_custom_call.1} parent=1 // pred_check_branch
      %37 = sbr.rel (0) target = $region17
    $region16: #{tpu_custom_call.1} parent=1 // pred_region
      %39 = dma.done [#allocation6], 128
    $region17: #{tpu_custom_call.1} parent=1 // pred_fallthru
      _
    %v40 = vld [vmem:[#allocation2] sm:$0xff]
    %v41 = vld [vmem:[#allocation5] sm:$0xff]
    %v42 = vmul.f32 %v40, %v40
    %43 = vadd.xlane.f32.xlu0 %v42
    %v44 = vpop.xlane.xlu0 %43
    %v45 = vmul.f32 %v41, %v41
    %46 = vadd.xlane.f32.xlu0 %v45
    %v47 = vpop.xlane.xlu0 %46
    %v48 = vrot.slane %v40, 4
    %v49 = vadd.f32 %v40, %v48
    %v50 = vrot.slane %v49, 2
    %v51 = vadd.f32 %v49, %v50
    %v52 = vrot.slane %v51, 1
    %v53 = vadd.f32 %v51, %v52
    %v54 = vrot.slane %v41, 4
    %v55 = vadd.f32 %v41, %v54
    %v56 = vrot.slane %v55, 2
    %v57 = vadd.f32 %v55, %v56
    %v58 = vrot.slane %v57, 1
    %v59 = vadd.f32 %v57, %v58
    %v60 = vadd.f32 %v53, %v59
    %vm61 = vcmask 7168
    %v62 = vsel %vm61, %v44, 0.0
    %63 = vadd.xlane.f32.xlu0 %v62
    %v64 = vpop.xlane.xlu0 %63
    %v65 = vrot.slane %v64, 4
    %v66 = vadd.f32 %v64, %v65
    %v67 = vrot.slane %v66, 2
    %v68 = vadd.f32 %v66, %v67
    %v69 = vrot.slane %v68, 1
    %v70 = vadd.f32 %v68, %v69
    %s71 = vtos %v70
    %v72 = vsel %vm61, %v47, 0.0
    %73 = vadd.xlane.f32.xlu0 %v72
    %v74 = vpop.xlane.xlu0 %73
    %v75 = vrot.slane %v74, 4
    %v76 = vadd.f32 %v74, %v75
    %v77 = vrot.slane %v76, 2
    %v78 = vadd.f32 %v76, %v77
    %v79 = vrot.slane %v78, 1
    %v80 = vadd.f32 %v78, %v79
    %s81 = vtos %v80
    %s82 = sadd.f32 %s71, %s81
    %s83 = smul.f32 %s82, 32.0
    %v84 = vmul.f32 %v60, %v60
    %vm85 = vcmask 1040384
    %v86 = vsel %vm85, %v84, 0.0
    %87 = vadd.xlane.f32.xlu0 %v86
    %v88 = vpop.xlane.xlu0 %87
    %v89 = vrot.slane %v88, 4
    %v90 = vadd.f32 %v88, %v89
    %v91 = vrot.slane %v90, 2
    %v92 = vadd.f32 %v90, %v91
    %v93 = vrot.slane %v92, 1
    %v94 = vadd.f32 %v92, %v93
    %s95 = vtos %v94
    %s96 = smul.f32 %s95, 2.0
    %s97 = ssub.f32 %s83, %s96
    %v98 = vrcp.pop 240.0
    %v99 = vmul.f32 240.0, %v98
    %v100 = vsub.f32 1.0, %v99
    %v101 = vmul.f32 %v98, %v100
    %v102 = vadd.f32 %v98, %v101
    %vm103 = vweird.f32 %v98
    %v104 = vsel %vm103, %v98, %v102
    %s105 = vtos %v104
    %s106 = smul.f32 %s97, %s105
    %v107 = vstv %s106
    %v108 = vrcp.pop %v107
    %v109 = vmul.f32 %v107, %v108
    %v110 = vsub.f32 1.0, %v109
    %v111 = vmul.f32 %v108, %v110
    %v112 = vadd.f32 %v108, %v111
    %vm113 = vweird.f32 %v107
    %vm114 = vweird.f32 %v108
    %vm115 = vmor %vm113, %vm114
    %v116 = vsel %vm115, %v108, %v112
    %v117 = vand.u32 2147483647, %v107
    %vm118 = vcmp.eq.f32.partialorder %v117, 8.507059e+37
    %v119 = vand.u32 %v107, 2147483648
    %v120 = vor.u32 1.1754944e-38, %v119
    %v121 = vsel %vm118, %v120, %v116
    %s122 = vtos %v121
    %s123 = smul.f32 -1.0, %s122
    %124 = vmatpush.xpose.msra.mxu0 0.0
    %125 = vmatpush.xpose.msra.mxu0 0.0
    %126 = vmatpush.xpose.msra.mxu0 0.0
    %127 = vmatpush.xpose.msra.mxu0 0.0
    %128 = vmatpush.xpose.msra.mxu0 0.0
    %129 = vmatpush.xpose.msra.mxu0 0.0
    %130 = vmatpush.xpose.msra.mxu0 0.0
    %131 = vmatpush.xpose.msra.mxu0 0.0
    %132 = vmatpush.xpose.msra.mxu0 0.0
    %133 = vmatpush.xpose.msra.mxu0 0.0
    %134 = vmatpush.xpose.msra.mxu0 0.0
    %135 = vmatpush.xpose.msra.mxu0 0.0
    %136 = vmatpush.xpose.msra.mxu0 0.0
    %137 = vmatpush.xpose.msra.mxu0 0.0
    %138 = vmatpush.xpose.msra.mxu0 0.0
    %139 = vmatpush.xpose.msra.mxu0 %v40
    %140 = vmatmul.f32.gmra.mxu0 %v40
    %v141 = vpop.f32.mrf.mxu0
    %v142 = vadd.f32 0.0, %v141
    %143 = vdwg.mxu0
    %144 = vxpose.xlu0.b32.start [1/16] %v44, 128
    %145 = vxpose.xlu0.b32.cont [2/16] 0.0, 128
    %146 = vxpose.xlu0.b32.cont [3/16] 0.0, 128
    %147 = vxpose.xlu0.b32.cont [4/16] 0.0, 128
    %148 = vxpose.xlu0.b32.cont [5/16] 0.0, 128
    %149 = vxpose.xlu0.b32.cont [6/16] 0.0, 128
    %150 = vxpose.xlu0.b32.cont [7/16] 0.0, 128
    %151 = vxpose.xlu0.b32.cont [8/16] 0.0, 128
    %152 = vxpose.xlu0.b32.cont [9/16] 0.0, 128
    %153 = vxpose.xlu0.b32.cont [10/16] 0.0, 128
    %154 = vxpose.xlu0.b32.cont [11/16] 0.0, 128
    %155 = vxpose.xlu0.b32.cont [12/16] 0.0, 128
    %156 = vxpose.xlu0.b32.cont [13/16] 0.0, 128
    %157 = vxpose.xlu0.b32.cont [14/16] 0.0, 128
    %158 = vxpose.xlu0.b32.cont [15/16] 0.0, 128
    %159 = vxpose.xlu0.b32.end [16/16] 0.0, 128
    %v160 = vpop.trf.xlu0
    %v161 = vpop.trf.xlu0
    %v162 = vpop.trf.xlu0
    %v163 = vpop.trf.xlu0
    %v164 = vpop.trf.xlu0
    %v165 = vpop.trf.xlu0
    %v166 = vpop.trf.xlu0
    %v167 = vpop.trf.xlu0
    %v168 = vpop.trf.xlu0
    %v169 = vpop.trf.xlu0
    %v170 = vpop.trf.xlu0
    %v171 = vpop.trf.xlu0
    %v172 = vpop.trf.xlu0
    %v173 = vpop.trf.xlu0
    %v174 = vpop.trf.xlu0
    %v175 = vpop.trf.xlu0
    %v176 = vperm.slane %v160, 0
    %v177 = vadd.f32 %v44, %v176
    %v178 = vmul.f32 %v142, 2.0
    %v179 = vsub.f32 %v177, %v178
    %v180 = vmax.f32 %v179, 0.0
    %v181 = vstv %s123
    %v182 = vmul.f32 %v180, %v181
    %v183 = vmul.f32 %v182, 1.442695
    %v184 = vpow.pop %v183
    %vm185 = vcmask 64512
    %v186 = vsel %vm185, %v184, 0.0
    %187 = vadd.xlane.f32.xlu0 %v186
    %v188 = vpop.xlane.xlu0 %187
    %v189 = vrot.slane %v188, 4
    %v190 = vadd.f32 %v188, %v189
    %v191 = vrot.slane %v190, 2
    %v192 = vadd.f32 %v190, %v191
    %v193 = vrot.slane %v192, 1
    %v194 = vadd.f32 %v192, %v193
    %s195 = vtos %v194
    %196 = vmatpush.xpose.msra.mxu0 0.0
    %197 = vmatpush.xpose.msra.mxu0 0.0
    %198 = vmatpush.xpose.msra.mxu0 0.0
    %199 = vmatpush.xpose.msra.mxu0 0.0
    %200 = vmatpush.xpose.msra.mxu0 0.0
    %201 = vmatpush.xpose.msra.mxu0 0.0
    %202 = vmatpush.xpose.msra.mxu0 0.0
    %203 = vmatpush.xpose.msra.mxu0 0.0
    %204 = vmatpush.xpose.msra.mxu0 0.0
    %205 = vmatpush.xpose.msra.mxu0 0.0
    %206 = vmatpush.xpose.msra.mxu0 0.0
    %207 = vmatpush.xpose.msra.mxu0 0.0
    %208 = vmatpush.xpose.msra.mxu0 0.0
    %209 = vmatpush.xpose.msra.mxu0 0.0
    %210 = vmatpush.xpose.msra.mxu0 0.0
    %211 = vmatpush.xpose.msra.mxu0 %v41
    %212 = vmatmul.f32.gmra.mxu0 %v41
    %v213 = vpop.f32.mrf.mxu0
    %v214 = vadd.f32 0.0, %v213
    %215 = vdwg.mxu0
    %216 = vxpose.xlu0.b32.start [1/16] %v47, 128
    %217 = vxpose.xlu0.b32.cont [2/16] 0.0, 128
    %218 = vxpose.xlu0.b32.cont [3/16] 0.0, 128
    %219 = vxpose.xlu0.b32.cont [4/16] 0.0, 128
    %220 = vxpose.xlu0.b32.cont [5/16] 0.0, 128
    %221 = vxpose.xlu0.b32.cont [6/16] 0.0, 128
    %222 = vxpose.xlu0.b32.cont [7/16] 0.0, 128
    %223 = vxpose.xlu0.b32.cont [8/16] 0.0, 128
    %224 = vxpose.xlu0.b32.cont [9/16] 0.0, 128
    %225 = vxpose.xlu0.b32.cont [10/16] 0.0, 128
    %226 = vxpose.xlu0.b32.cont [11/16] 0.0, 128
    %227 = vxpose.xlu0.b32.cont [12/16] 0.0, 128
    %228 = vxpose.xlu0.b32.cont [13/16] 0.0, 128
    %229 = vxpose.xlu0.b32.cont [14/16] 0.0, 128
    %230 = vxpose.xlu0.b32.cont [15/16] 0.0, 128
    %231 = vxpose.xlu0.b32.end [16/16] 0.0, 128
    %v232 = vpop.trf.xlu0
    %v233 = vpop.trf.xlu0
    %v234 = vpop.trf.xlu0
    %v235 = vpop.trf.xlu0
    %v236 = vpop.trf.xlu0
    %v237 = vpop.trf.xlu0
    %v238 = vpop.trf.xlu0
    %v239 = vpop.trf.xlu0
    %v240 = vpop.trf.xlu0
    %v241 = vpop.trf.xlu0
    %v242 = vpop.trf.xlu0
    %v243 = vpop.trf.xlu0
    %v244 = vpop.trf.xlu0
    %v245 = vpop.trf.xlu0
    %v246 = vpop.trf.xlu0
    %v247 = vpop.trf.xlu0
    %v248 = vperm.slane %v232, 0
    %v249 = vadd.f32 %v47, %v248
    %v250 = vmul.f32 %v214, 2.0
    %v251 = vsub.f32 %v249, %v250
    %v252 = vmax.f32 %v251, 0.0
    %v253 = vmul.f32 %v252, %v181
    %v254 = vmul.f32 %v253, 1.442695
    %v255 = vpow.pop %v254
    %v256 = vsel %vm185, %v255, 0.0
    %257 = vadd.xlane.f32.xlu0 %v256
    %v258 = vpop.xlane.xlu0 %257
    %v259 = vrot.slane %v258, 4
    %v260 = vadd.f32 %v258, %v259
    %v261 = vrot.slane %v260, 2
    %v262 = vadd.f32 %v260, %v261
    %v263 = vrot.slane %v262, 1
    %v264 = vadd.f32 %v262, %v263
    %s265 = vtos %v264
    %s266 = sadd.f32 %s195, %s265
    %267 = vmatpush.xpose.msra.mxu0 0.0
    %268 = vmatpush.xpose.msra.mxu0 0.0
    %269 = vmatpush.xpose.msra.mxu0 0.0
    %270 = vmatpush.xpose.msra.mxu0 0.0
    %271 = vmatpush.xpose.msra.mxu0 0.0
    %272 = vmatpush.xpose.msra.mxu0 0.0
    %273 = vmatpush.xpose.msra.mxu0 0.0
    %274 = vmatpush.xpose.msra.mxu0 0.0
    %275 = vmatpush.xpose.msra.mxu0 0.0
    %276 = vmatpush.xpose.msra.mxu0 0.0
    %277 = vmatpush.xpose.msra.mxu0 0.0
    %278 = vmatpush.xpose.msra.mxu0 0.0
    %279 = vmatpush.xpose.msra.mxu0 0.0
    %280 = vmatpush.xpose.msra.mxu0 0.0
    %281 = vmatpush.xpose.msra.mxu0 0.0
    %282 = vmatpush.xpose.msra.mxu0 %v41
    %283 = vmatmul.f32.gmra.mxu0 %v40
    %v284 = vpop.f32.mrf.mxu0
    %v285 = vadd.f32 0.0, %v284
    %286 = vdwg.mxu0
    %v287 = vadd.f32 %v44, %v248
    %v288 = vmul.f32 %v285, 2.0
    %v289 = vsub.f32 %v287, %v288
    %v290 = vmax.f32 %v289, 0.0
    %v291 = vmul.f32 %v290, %v181
    %v292 = vmul.f32 %v291, 1.442695
    %v293 = vpow.pop %v292
    %v294 = vsel %vm185, %v293, 0.0
    %295 = vadd.xlane.f32.xlu0 %v294
    %v296 = vpop.xlane.xlu0 %295
    %v297 = vrot.slane %v296, 4
    %v298 = vadd.f32 %v296, %v297
    %v299 = vrot.slane %v298, 2
    %v300 = vadd.f32 %v298, %v299
    %v301 = vrot.slane %v300, 1
    %v302 = vadd.f32 %v300, %v301
    %s303 = vtos %v302
    %s304 = smul.f32 %s303, 2.0
    %s305 = ssub.f32 %s266, %s304
    %v306 = vrcp.pop 64.0
    %v307 = vmul.f32 64.0, %v306
    %v308 = vsub.f32 1.0, %v307
    %v309 = vmul.f32 %v306, %v308
    %v310 = vadd.f32 %v306, %v309
    %vm311 = vweird.f32 %v306
    %v312 = vsel %vm311, %v306, %v310
    %s313 = vtos %v312
    %s314 = smul.f32 %s305, %s313
    %v315 = vstv %s314
    %vm316 = vcmask 0
    %317 = vst.msk [vmem:[#allocation7] sm:$0x1] %vm316, %v315
    // Predicated region
    $region18: #{tpu_custom_call.1} parent=1 // pred_check
      _
    $region19: #{tpu_custom_call.1} parent=1 // pred_check_branch
      %319 = sbr.rel (0) target = $region21
    $region20: #{tpu_custom_call.1} parent=1 // pred_region
      %321 = vsyncadd [#allocation4], 0
      %s323 = sshll.u32 [#allocation7], 4
      %s324 = int_to_ptr.vmem [resolvable:$true] %s323
      %s325 = sshll.u32 %s2, 4
      %s326 = int_to_ptr.hbm [resolvable:$true] %s325
      %328 = dma.vmem_to_hbm [thread:$0]  %s324, 16, %s326, [#allocation4]
    $region21: #{tpu_custom_call.1} parent=1 // pred_fallthru
      _
    // Predicated region
    $region22: #{tpu_custom_call.1} parent=1 // pred_check
      _
    $region23: #{tpu_custom_call.1} parent=1 // pred_check_branch
      %330 = sbr.rel (0) target = $region25
    $region24: #{tpu_custom_call.1} parent=1 // pred_region
      %332 = dma.done [#allocation4], 16
    $region25: #{tpu_custom_call.1} parent=1 // pred_fallthru
      _
    %333 = vsyncpa [#allocation3], 1
    %334 = vsyncpa [#allocation6], 1
    %335 = vsyncpa [#allocation4], 1

</llo_original>
